<compile_context>
chip_gen: v5e
topology: v5e:2x2
jax: 0.10.0
libtpu: 0.0.40
codegen_flags: <defaults>
</compile_context>

<pallas_src>
import functools

import jax
import jax.numpy as jnp
from jax.experimental import pallas as pl
from jax.experimental.pallas import tpu as pltpu


def _sigmoidf1_partial_kernel(b_ref, yhat_ref, y_ref, tp_ref, s_ref,
                              *, beta: float, eta: float,
                              batch_tile: int, group: int, need_mask: bool):
    """One (batch chunk, class tile) -> (8, C_tile) partials of sig*y and sig+y."""
    c = yhat_ref.shape[-1]
    ngroups = batch_tile // group
    chunk_row0 = pl.program_id(0) * batch_tile

    # Zero the resident output block; accumulate into it group by group.
    tp_ref[0] = jnp.zeros((8, c), jnp.float32)
    s_ref[0] = jnp.zeros((8, c), jnp.float32)

    def run(masked: bool):
        def body(g, carry):
            r0 = pl.multiple_of(g * group, group)
            yhat = yhat_ref[pl.ds(r0, group), :].astype(jnp.float32)
            yv = y_ref[pl.ds(r0, group), :].astype(jnp.float32)
            # sigmoid(x) == 0.5 * tanh(x/2) + 0.5 : a single EUP transcendental.
            sig = 0.5 * jnp.tanh((0.5 * beta) * (yhat + eta)) + 0.5
            if masked:
                rows = (chunk_row0 + r0
                        + jax.lax.broadcasted_iota(jnp.int32, (group, c), 0))
                valid = rows < b_ref[0]
                # Select, NOT multiply: OOB rows may hold NaN/Inf garbage.
                sig = jnp.where(valid, sig, 0.0)
                yv = jnp.where(valid, yv, 0.0)
            gg = group // 8
            # Reduce the group to (8, c) with pure vreg adds; the cross-sublane
            # (8 -> 1) reduce happens once, in the JAX finalize.
            tp_ref[0] = tp_ref[0] + jnp.sum((sig * yv).reshape(gg, 8, c), axis=0)
            s_ref[0] = s_ref[0] + jnp.sum((sig + yv).reshape(gg, 8, c), axis=0)
            return carry

        jax.lax.fori_loop(0, ngroups, body, 0, unroll=(ngroups <= 4))

    if need_mask:
        # Only the last chunk can be ragged: pay the mask only there.
        is_last = pl.program_id(0) == pl.num_programs(0) - 1

        @pl.when(jnp.logical_not(is_last))
        def _():
            run(masked=False)

        @pl.when(is_last)
        def _():
            run(masked=True)
    else:
        run(masked=False)


def _choose_group(batch_tile: int) -> int:
    for g in (128, 64, 32, 16, 8):
        if batch_tile % g == 0:
            return g
    return 8


def _choose_class_tile(num_classes: int) -> int:
    if num_classes <= 2048 or num_classes % 128 != 0:
        return num_classes
    return 2048


def _vmem_budget() -> tuple[int, int]:
    """(input budget bytes, vmem_limit cap bytes), generation-aware."""
    phys = None
    try:
        info = pltpu.get_tpu_info()
        phys = getattr(info, "vmem_capacity_bytes", None)
    except Exception:
        phys = None
    if phys is None or phys <= (64 << 20):     # v7x-like (64 MiB) / unknown
        return 16 << 20, 48 << 20
    return 48 << 20, 96 << 20                  # v5e / v6e (128 MiB physical)


def _auto_batch_tile(batch: int, class_tile: int, yhat_isz: int, y_isz: int,
                     budget_bytes: int, row_align: int = 8,
                     cap: int = 4096) -> int:
    """Largest row tile whose honest VMEM footprint fits the budget."""
    padded_b = -(-batch // row_align) * row_align
    per_row = 2 * (yhat_isz + y_isz) * class_tile          # input double buffers
    fixed = (2 * 2 * 8 * class_tile * 4                    # output double buffers
             + 6 * 128 * class_tile * 4)                   # group f32 temporaries
    rows = max(budget_bytes - fixed, row_align * per_row) // max(per_row, 1)
    rows = max(row_align, min(int(rows), cap, padded_b))
    rows = (rows // row_align) * row_align
    # Give the "parallel" batch axis >= 2 chunks when possible (v7x megacore).
    half = ((padded_b // 2) // row_align) * row_align
    if half >= row_align:
        rows = min(rows, half)
    return rows


def sigmoid_f1(y_hat: jax.Array, y: jax.Array,
               beta: float = 1.0, eta: float = 0.0,
               batch_tile: int | None = None,
               class_tile: int | None = None) -> jax.Array:
    """Pallas implementation of SigmoidF1.forward. Inputs: (B, C). Returns scalar."""
    assert y_hat.shape == y.shape and y_hat.ndim == 2
    B, C = y_hat.shape

    yhat_isz = jnp.dtype(y_hat.dtype).itemsize
    y_isz = jnp.dtype(y.dtype).itemsize
    budget_bytes, limit_cap = _vmem_budget()

    if class_tile is None:
        class_tile = _choose_class_tile(C)
    num_ctiles = pl.cdiv(C, class_tile)

    if batch_tile is None:
        # Row alignment follows the narrowest input dtype's sublane packing.
        row_align = max(8, 32 // max(1, min(yhat_isz, y_isz)))
        batch_tile = _auto_batch_tile(B, class_tile, yhat_isz, y_isz,
                                      budget_bytes, row_align=row_align)
    assert batch_tile % 8 == 0, "batch_tile must be a multiple of 8"

    group = _choose_group(int(batch_tile))
    num_chunks = pl.cdiv(B, batch_tile)
    need_mask = (num_chunks * batch_tile) != B

    kernel = functools.partial(
        _sigmoidf1_partial_kernel,
        beta=float(beta), eta=float(eta),
        batch_tile=int(batch_tile), group=int(group), need_mask=bool(need_mask),
    )

    part_shape = jax.ShapeDtypeStruct((num_chunks, 8, C), jnp.float32)
    part_spec = pl.BlockSpec((1, 8, class_tile), lambda i, j, b: (i, 0, j))
    in_spec = pl.BlockSpec((batch_tile, class_tile), lambda i, j, b: (i, j))

    # Honest per-step VMEM: input double buffers + output buffers + group temps.
    vmem_needed = (2 * (yhat_isz + y_isz) * batch_tile * class_tile
                   + 2 * 2 * 8 * class_tile * 4
                   + 6 * group * class_tile * 4
                   + (4 << 20))
    vmem_limit = int(min(max(vmem_needed, 32 << 20), limit_cap))

    tp_p, s_p = pl.pallas_call(
        kernel,
        out_shape=(part_shape, part_shape),
        grid_spec=pltpu.PrefetchScalarGridSpec(
            num_scalar_prefetch=1,                        # true batch size B
            grid=(num_chunks, num_ctiles),
            in_specs=[in_spec, in_spec],
            out_specs=[part_spec, part_spec],
        ),
        compiler_params=pltpu.CompilerParams(
            dimension_semantics=("parallel", "parallel"),
            vmem_limit_bytes=vmem_limit,
        ),
    )(jnp.array([B], dtype=jnp.int32), y_hat, y)

    # Tiny per-class finalize in plain JAX.
    tp = jnp.sum(tp_p, axis=(0, 1))                # sum(sig * y)
    s = jnp.sum(s_p, axis=(0, 1))                  # sum(sig) + sum(y) == 2tp+fp+fn
    return jnp.mean(1.0 - 2.0 * tp / (s + 1e-16))


def _reference(y_hat, y, beta=1.0, eta=0.0):
    sig = jax.nn.sigmoid(beta * (y_hat + eta))
    tp = jnp.sum(sig * y, axis=0)
    fp = jnp.sum(sig * (1.0 - y), axis=0)
    fn = jnp.sum((1.0 - sig) * y, axis=0)
    return jnp.mean(1.0 - 2.0 * tp / (2.0 * tp + fn + fp + 1e-16))


if __name__ == "__main__":
    key = jax.random.PRNGKey(0)
    k1, k2, k3, k4 = jax.random.split(key, 4)

    # Even batch: auto tile splits it into 2 parallel chunks, no mask path.
    B, C = 16, 128
    y_hat = jax.random.normal(k1, (B, C), dtype=jnp.float32)
    y = jax.random.bernoulli(k2, p=0.3, shape=(B, C)).astype(jnp.float32)

    loss = jax.block_until_ready(sigmoid_f1(y_hat, y, beta=1.0, eta=0.0))
    ref = _reference(y_hat, y, beta=1.0, eta=0.0)
    assert jnp.allclose(loss, ref, rtol=1e-5, atol=1e-5), (loss, ref)

    # Ragged batch with multiple chunks: exercises the last-chunk-only mask.
    B2, C2 = 13, 128
    y_hat2 = jax.random.normal(k3, (B2, C2), dtype=jnp.float32)
    y2 = jax.random.bernoulli(k4, p=0.5, shape=(B2, C2)).astype(jnp.float32)

    loss2 = jax.block_until_ready(
        sigmoid_f1(y_hat2, y2, beta=2.0, eta=0.1, batch_tile=8))
    ref2 = _reference(y_hat2, y2, beta=2.0, eta=0.1)
    assert jnp.allclose(loss2, ref2, rtol=1e-5, atol=1e-5), (loss2, ref2)

    # bf16 logits / bf16 labels (HBM-byte saving path); accumulation stays f32.
    y_hat3 = y_hat.astype(jnp.bfloat16)
    y3 = y.astype(jnp.bfloat16)
    loss3 = jax.block_until_ready(sigmoid_f1(y_hat3, y3, batch_tile=16))
    ref3 = _reference(y_hat3.astype(jnp.float32), y3.astype(jnp.float32))
    assert jnp.allclose(loss3, ref3, rtol=1e-4, atol=1e-4), (loss3, ref3)

    print("KERNEL_OK")
</pallas_src>

<mosaic_0001>
module attributes {stable_mosaic.version = 11 : i64} {
  func.func @_sigmoidf1_partial_kernel(%arg0: i32, %arg1: i32, %arg2: memref<1xi32, #tpu.memory_space<smem>>, %arg3: memref<8x128xf32, #tpu.memory_space<vmem>>, %arg4: memref<8x128xf32, #tpu.memory_space<vmem>>, %arg5: memref<1x8x128xf32, #tpu.memory_space<vmem>>, %arg6: memref<1x8x128xf32, #tpu.memory_space<vmem>>) attributes {dimension_semantics = [#tpu.dimension_semantics<parallel>, #tpu.dimension_semantics<parallel>], iteration_bounds = array<i64: 2, 1>, scalar_prefetch = 1 : i64, scratch_operands = 0 : i64, tpu.core_type = #tpu.core_type<tc>, window_params = [{transform_indices = @transform_0, window_bounds = array<i64: 8, 128>}, {transform_indices = @transform_1, window_bounds = array<i64: 8, 128>}, {transform_indices = @transform_2, window_bounds = array<i64: 1, 8, 128>}, {transform_indices = @transform_3, window_bounds = array<i64: 1, 8, 128>}]} {
    %cst = arith.constant 0.000000e+00 : f32
    %0 = vector.broadcast %cst : f32 to vector<8x128xf32>
    %c0 = arith.constant 0 : index
    %c0_0 = arith.constant 0 : index
    %c0_1 = arith.constant 0 : index
    %1 = vector.load %arg5[%c0, %c0_0, %c0_1] : memref<1x8x128xf32, #tpu.memory_space<vmem>>, vector<1x8x128xf32>
    %2 = vector.shape_cast %1 : vector<1x8x128xf32> to vector<8x128xf32>
    %3 = vector.shape_cast %0 : vector<8x128xf32> to vector<1x8x128xf32>
    tpu.vector_store %arg5[%c0, %c0_0, %c0_1], %3 {strides = array<i32>} : memref<1x8x128xf32, #tpu.memory_space<vmem>>, vector<1x8x128xf32>,
    %cst_2 = arith.constant 0.000000e+00 : f32
    %4 = vector.broadcast %cst_2 : f32 to vector<8x128xf32>
    %c0_3 = arith.constant 0 : index
    %c0_4 = arith.constant 0 : index
    %c0_5 = arith.constant 0 : index
    %5 = vector.load %arg6[%c0_3, %c0_4, %c0_5] : memref<1x8x128xf32, #tpu.memory_space<vmem>>, vector<1x8x128xf32>
    %6 = vector.shape_cast %5 : vector<1x8x128xf32> to vector<8x128xf32>
    %7 = vector.shape_cast %4 : vector<8x128xf32> to vector<1x8x128xf32>
    tpu.vector_store %arg6[%c0_3, %c0_4, %c0_5], %7 {strides = array<i32>} : memref<1x8x128xf32, #tpu.memory_space<vmem>>, vector<1x8x128xf32>,
    %c0_i32 = arith.constant 0 : i32
    %c8_i32 = arith.constant 8 : i32
    %8 = arith.muli %c0_i32, %c8_i32 : i32
    %9 = tpu.assume_multiple %8, 8 : i32
    %10 = arith.index_cast %9 : i32 to index
    %c0_6 = arith.constant 0 : index
    %11 = vector.load %arg3[%10, %c0_6] : memref<8x128xf32, #tpu.memory_space<vmem>>, vector<8x128xf32>
    %12 = arith.index_cast %9 : i32 to index
    %c0_7 = arith.constant 0 : index
    %13 = vector.load %arg4[%12, %c0_7] : memref<8x128xf32, #tpu.memory_space<vmem>>, vector<8x128xf32>
    %cst_8 = arith.constant 0.000000e+00 : f32
    %14 = vector.broadcast %cst_8 : f32 to vector<8x128xf32>
    %15 = arith.addf %11, %14 : vector<8x128xf32>
    %cst_9 = arith.constant 5.000000e-01 : f32
    %16 = vector.broadcast %cst_9 : f32 to vector<8x128xf32>
    %17 = arith.mulf %16, %15 : vector<8x128xf32>
    %18 = math.tanh %17 : vector<8x128xf32>
    %cst_10 = arith.constant 5.000000e-01 : f32
    %19 = vector.broadcast %cst_10 : f32 to vector<8x128xf32>
    %20 = arith.mulf %19, %18 : vector<8x128xf32>
    %cst_11 = arith.constant 5.000000e-01 : f32
    %21 = vector.broadcast %cst_11 : f32 to vector<8x128xf32>
    %22 = arith.addf %20, %21 : vector<8x128xf32>
    %c0_12 = arith.constant 0 : index
    %c0_13 = arith.constant 0 : index
    %c0_14 = arith.constant 0 : index
    %23 = vector.load %arg5[%c0_12, %c0_13, %c0_14] : memref<1x8x128xf32, #tpu.memory_space<vmem>>, vector<1x8x128xf32>
    %24 = vector.shape_cast %23 : vector<1x8x128xf32> to vector<8x128xf32>
    %25 = arith.mulf %22, %13 : vector<8x128xf32>
    %26 = vector.shape_cast %25 : vector<8x128xf32> to vector<1x8x128xf32>
    %cst_15 = arith.constant dense<0.000000e+00> : vector<8x128xf32>
    %27 = vector.multi_reduction <add>, %26, %cst_15 [0] : vector<1x8x128xf32> to vector<8x128xf32>
    %28 = arith.addf %24, %27 : vector<8x128xf32>
    %c0_16 = arith.constant 0 : index
    %c0_17 = arith.constant 0 : index
    %c0_18 = arith.constant 0 : index
    %29 = vector.load %arg5[%c0_16, %c0_17, %c0_18] : memref<1x8x128xf32, #tpu.memory_space<vmem>>, vector<1x8x128xf32>
    %30 = vector.shape_cast %29 : vector<1x8x128xf32> to vector<8x128xf32>
    %31 = vector.shape_cast %28 : vector<8x128xf32> to vector<1x8x128xf32>
    tpu.vector_store %arg5[%c0_16, %c0_17, %c0_18], %31 {strides = array<i32>} : memref<1x8x128xf32, #tpu.memory_space<vmem>>, vector<1x8x128xf32>,
    %c0_19 = arith.constant 0 : index
    %c0_20 = arith.constant 0 : index
    %c0_21 = arith.constant 0 : index
    %32 = vector.load %arg6[%c0_19, %c0_20, %c0_21] : memref<1x8x128xf32, #tpu.memory_space<vmem>>, vector<1x8x128xf32>
    %33 = vector.shape_cast %32 : vector<1x8x128xf32> to vector<8x128xf32>
    %34 = arith.addf %22, %13 : vector<8x128xf32>
    %35 = vector.shape_cast %34 : vector<8x128xf32> to vector<1x8x128xf32>
    %cst_22 = arith.constant dense<0.000000e+00> : vector<8x128xf32>
    %36 = vector.multi_reduction <add>, %35, %cst_22 [0] : vector<1x8x128xf32> to vector<8x128xf32>
    %37 = arith.addf %33, %36 : vector<8x128xf32>
    %c0_23 = arith.constant 0 : index
    %c0_24 = arith.constant 0 : index
    %c0_25 = arith.constant 0 : index
    %38 = vector.load %arg6[%c0_23, %c0_24, %c0_25] : memref<1x8x128xf32, #tpu.memory_space<vmem>>, vector<1x8x128xf32>
    %39 = vector.shape_cast %38 : vector<1x8x128xf32> to vector<8x128xf32>
    %40 = vector.shape_cast %37 : vector<8x128xf32> to vector<1x8x128xf32>
    tpu.vector_store %arg6[%c0_23, %c0_24, %c0_25], %40 {strides = array<i32>} : memref<1x8x128xf32, #tpu.memory_space<vmem>>, vector<1x8x128xf32>,
    %c1_i32 = arith.constant 1 : i32
    return
  }
  func.func @transform_0(%arg0: i32, %arg1: i32, %arg2: memref<1xi32, #tpu.memory_space<smem>>) -> (i32, i32) {
    %c0_i32 = arith.constant 0 : i32
    return %arg0, %arg1 : i32, i32
  }
  func.func @transform_1(%arg0: i32, %arg1: i32, %arg2: memref<1xi32, #tpu.memory_space<smem>>) -> (i32, i32) {
    %c0_i32 = arith.constant 0 : i32
    return %arg0, %arg1 : i32, i32
  }
  func.func @transform_2(%arg0: i32, %arg1: i32, %arg2: memref<1xi32, #tpu.memory_space<smem>>) -> (i32, i32, i32) {
    %c0_i32 = arith.constant 0 : i32
    %c0_i32_0 = arith.constant 0 : i32
    return %arg0, %c0_i32, %arg1 : i32, i32, i32
  }
  func.func @transform_3(%arg0: i32, %arg1: i32, %arg2: memref<1xi32, #tpu.memory_space<smem>>) -> (i32, i32, i32) {
    %c0_i32 = arith.constant 0 : i32
    %c0_i32_0 = arith.constant 0 : i32
    return %arg0, %c0_i32, %arg1 : i32, i32, i32
  }
}

</mosaic_0001>

<llo_original>
// kernel: tpu_custom_call.1
$region0: #{tpu_custom_call.1}
  #allocation0 [shape = 'u32[]', space=smem, size = 0x4, offset = 0x4, fixed_abs, tag = 'smem constant byte address 0x4 - core index']
  #allocation1 [shape = 'u32[72,128]{1,0:T(1,128)}', space=vmem, size = 0x9000, scoped, tag = 'internal scratch']
  #allocation2 [shape = 's32[1]{0}', space=sflag, size = 0x4, scoped, tag = 'scoped memory for tpu_custom_call.1']
  #allocation3 [shape = 's32[1]{0:T(128)S(6)}', space=smem, size = 0x200, scoped, tag = 'prefetched SMEM operand 0']
  %s0 = inlined_call_operand.<no memory space> [shape: s32[1], index: 0, kind: input, shape index: {}]
  %s1 = inlined_call_operand.hbm [shape: f32[16,128], index: 1, kind: input, shape index: {}]
  %s2 = inlined_call_operand.hbm [shape: f32[16,128], index: 2, kind: input, shape index: {}]
  %s3 = inlined_call_operand.hbm [shape: f32[2,8,128], index: 3, kind: output, shape index: {0}]
  %s4 = inlined_call_operand.hbm [shape: f32[2,8,128], index: 4, kind: output, shape index: {1}]
  %5 = xla_tuple %s3, %s4
  %s6 = sld [smem:[#allocation0]]
  $region57: #{tpu_custom_call.1} parent=0
    _
  %s8 = ssub.s32 1, %s6
  %s9 = scalar_select 0, %s8, %s6
  %10 = sst [smem:[#allocation3]] %s0
  $region1: #{tpu_custom_call.1} parent=0
    #allocation4 [shape = 'u8[8192]{0}', space=vmem, size = 0x2000, scoped, tag = 'input window, operand 1']
    #allocation5 [shape = 's32[2]{0}', space=sflag, size = 0x8, scoped, tag = 'scoped memory for tpu_custom_call.1']
    #allocation6 [shape = 's32[2]{0}', space=sflag, size = 0x8, scoped, tag = 'scoped memory for tpu_custom_call.1']
    #allocation7 [shape = 'u8[8192]{0}', space=vmem, size = 0x2000, scoped, tag = 'input window, operand 2']
    #allocation8 [shape = 's32[2]{0}', space=sflag, size = 0x8, scoped, tag = 'scoped memory for tpu_custom_call.1']
    #allocation9 [shape = 'u8[8192]{0}', space=vmem, size = 0x2000, scoped, tag = 'output window, operand 0']
    #allocation10 [shape = 'u8[8192]{0}', space=vmem, size = 0x2000, scoped, tag = 'output window, operand 1']
    #allocation11 [shape = 's32[2]{0}', space=sflag, size = 0x8, scoped, tag = 'scoped memory for tpu_custom_call.1']
    %11 = vsyncpa [#allocation5], 0
    %s12 = scalar_lea.sflag [#allocation5], 1
    %13 = vsyncpa %s12, 0
    %14 = vsyncpa [#allocation8], 0
    %s15 = scalar_lea.sflag [#allocation8], 1
    %16 = vsyncpa %s15, 0
    %17 = vsyncpa [#allocation6], 0
    %s18 = scalar_lea.sflag [#allocation6], 1
    %19 = vsyncpa %s18, 0
    %20 = vsyncpa [#allocation11], 0
    %s21 = scalar_lea.sflag [#allocation11], 1
    %22 = vsyncpa %s21, 0
    loop: start=0, step=1, limit=4
    $region2: #{tpu_custom_call.1} parent=1 // loop_pre_header
      _
    $region3: #{tpu_custom_call.1} parent=1 // loop_header
      %s24 = sphi 0, %s28
      %p25 = scmp.ge.s32.totalorder %s24, 4
      %s31 = sphi 0, %s43
      %s32 = sphi 0, %s39
      %s33 = sphi 0, %s31
      %s34 = sphi 0, %s32
      %s35 = sphi 0, %s33
      %s36 = sphi 0, %s34
      %s48 = sphi 0, %s50
      %s51 = sphi 0, %s48
      %s52 = sphi 0, %s51
      %s68 = sphi 0, %s52
      %s76 = sphi 0, %s78
      %s79 = sphi 0, %s76
      %s80 = sphi 0, %s79
      %s96 = sphi 0, %s80
      %s104 = sphi 0, %s106
      %s107 = sphi 0, %s104
      %s108 = sphi 0, %s107
      %s124 = sphi 0, %s108
      %s132 = sphi 0, %s134
      %s135 = sphi 0, %s132
      %s136 = sphi 0, %s135
      %s152 = sphi 0, %s136
    $region4: #{tpu_custom_call.1} parent=1 // loop_header_branch
      %27 = sbr.rel (%p25) target = $region8
    $region5: #{tpu_custom_call.1} parent=1 // loop_body
      %s29 = ssub.s32 %s24, 1
      %s30 = ssub.s32 %s24, 2
      %s37 = sadd.s32 1, %s32
      %p38 = scmp.ge.s32.totalorder %s37, 1
      %s39 = scalar_select %p38, 0, %s37
      %s40 = sadd.s32 1, %s31
      %s41 = scalar_select %p38, %s40, %s31
      %p42 = scmp.ge.s32.totalorder %s41, 2
      %s43 = scalar_select %p42, 0, %s41
      %s44 = ssub.s32 %s31, %s43
      %s45 = ssub.s32 %s32, %s39
      %s46 = sor.u32 %s44, %s45
      %p47 = scmp.eq.s32.totalorder %s46, 0
      %s49 = sadd.s32 %s48, 1
      %s50 = scalar_select %p47, %s48, %s49
      %p53 = pneg %p47
      %p54 = scmp.eq.s32.totalorder %s24, 1
      %p55 = por %p53, %p54
      %p56 = scmp.ne.s32.totalorder %s48, %s51
      %p57 = scmp.eq.s32.totalorder %s24, 0
      %p58 = por %p56, %p57
      %p59 = scmp.ne.s32.totalorder %s48, %s51
      %p60 = scmp.eq.s32.totalorder %s29, 1
      %p61 = por %p59, %p60
      %p62 = scmp.ne.s32.totalorder %s51, %s52
      %p63 = scmp.eq.s32.totalorder %s29, 0
      %p64 = por %p62, %p63
      %p65 = scmp.ne.s32.totalorder %s51, %s52
      %p66 = scmp.eq.s32.totalorder %s30, 1
      %p67 = por %p65, %p66
      %p69 = scmp.ne.s32.totalorder %s52, %s68
      %p70 = scmp.eq.s32.totalorder %s30, 0
      %p71 = por %p69, %p70
      %s72 = ssub.s32 %s31, %s43
      %s73 = ssub.s32 %s32, %s39
      %s74 = sor.u32 %s72, %s73
      %p75 = scmp.eq.s32.totalorder %s74, 0
      %s77 = sadd.s32 %s76, 1
      %s78 = scalar_select %p75, %s76, %s77
      %p81 = pneg %p75
      %p82 = scmp.eq.s32.totalorder %s24, 1
      %p83 = por %p81, %p82
      %p84 = scmp.ne.s32.totalorder %s76, %s79
      %p85 = scmp.eq.s32.totalorder %s24, 0
      %p86 = por %p84, %p85
      %p87 = scmp.ne.s32.totalorder %s76, %s79
      %p88 = scmp.eq.s32.totalorder %s29, 1
      %p89 = por %p87, %p88
      %p90 = scmp.ne.s32.totalorder %s79, %s80
      %p91 = scmp.eq.s32.totalorder %s29, 0
      %p92 = por %p90, %p91
      %p93 = scmp.ne.s32.totalorder %s79, %s80
      %p94 = scmp.eq.s32.totalorder %s30, 1
      %p95 = por %p93, %p94
      %p97 = scmp.ne.s32.totalorder %s80, %s96
      %p98 = scmp.eq.s32.totalorder %s30, 0
      %p99 = por %p97, %p98
      %s100 = ssub.s32 %s31, %s43
      %s101 = ssub.s32 %s32, %s39
      %s102 = sor.u32 %s100, %s101
      %p103 = scmp.eq.s32.totalorder %s102, 0
      %s105 = sadd.s32 %s104, 1
      %s106 = scalar_select %p103, %s104, %s105
      %p109 = pneg %p103
      %p110 = scmp.eq.s32.totalorder %s24, 1
      %p111 = por %p109, %p110
      %p112 = scmp.ne.s32.totalorder %s104, %s107
      %p113 = scmp.eq.s32.totalorder %s24, 0
      %p114 = por %p112, %p113
      %p115 = scmp.ne.s32.totalorder %s104, %s107
      %p116 = scmp.eq.s32.totalorder %s29, 1
      %p117 = por %p115, %p116
      %p118 = scmp.ne.s32.totalorder %s107, %s108
      %p119 = scmp.eq.s32.totalorder %s29, 0
      %p120 = por %p118, %p119
      %p121 = scmp.ne.s32.totalorder %s107, %s108
      %p122 = scmp.eq.s32.totalorder %s30, 1
      %p123 = por %p121, %p122
      %p125 = scmp.ne.s32.totalorder %s108, %s124
      %p126 = scmp.eq.s32.totalorder %s30, 0
      %p127 = por %p125, %p126
      %s128 = ssub.s32 %s31, %s43
      %s129 = ssub.s32 %s32, %s39
      %s130 = sor.u32 %s128, %s129
      %p131 = scmp.eq.s32.totalorder %s130, 0
      %s133 = sadd.s32 %s132, 1
      %s134 = scalar_select %p131, %s132, %s133
      %p137 = pneg %p131
      %p138 = scmp.eq.s32.totalorder %s24, 1
      %p139 = por %p137, %p138
      %p140 = scmp.ne.s32.totalorder %s132, %s135
      %p141 = scmp.eq.s32.totalorder %s24, 0
      %p142 = por %p140, %p141
      %p143 = scmp.ne.s32.totalorder %s132, %s135
      %p144 = scmp.eq.s32.totalorder %s29, 1
      %p145 = por %p143, %p144
      %p146 = scmp.ne.s32.totalorder %s135, %s136
      %p147 = scmp.eq.s32.totalorder %s29, 0
      %p148 = por %p146, %p147
      %p149 = scmp.ne.s32.totalorder %s135, %s136
      %p150 = scmp.eq.s32.totalorder %s30, 1
      %p151 = por %p149, %p150
      %p153 = scmp.ne.s32.totalorder %s136, %s152
      %p154 = scmp.eq.s32.totalorder %s30, 0
      %p155 = por %p153, %p154
      %p156 = scmp.le.s32.totalorder 1, %s24
      %p157 = scmp.lt.s32.totalorder %s24, 3
      %p158 = pnand %p156, %p157
      %p159 = pneg %p158
      // Predicated region
      $region9: #{tpu_custom_call.1} parent=5 // pred_check
        _
      $region10: #{tpu_custom_call.1} parent=5 // pred_check_branch
        %161 = sbr.rel (%p158) target = $region12
      $region11: #{tpu_custom_call.1} parent=5 // pred_region
        %s162 = ssub.s32 %s24, 1
      $region12: #{tpu_custom_call.1} parent=5 // pred_fallthru
        _
      %p163 = scmp.lt.s32.totalorder %s24, 2
      // Predicated region
      $region13: #{tpu_custom_call.1} parent=5 // pred_check
        %p164 = pneg %p163
      $region14: #{tpu_custom_call.1} parent=5 // pred_check_branch
        %166 = sbr.rel (%p164) target = $region16
      $region15: #{tpu_custom_call.1} parent=5 // pred_region
        // Predicated region
        $region17: #{tpu_custom_call.1} parent=15 // pred_check
          %p167 = pneg %p58
        $region18: #{tpu_custom_call.1} parent=15 // pred_check_branch
          %169 = sbr.rel (%p167) target = $region20
        $region19: #{tpu_custom_call.1} parent=15 // pred_region
          %s170 = sand.u32 %s48, 1
          %s171 = scalar_lea.sflag [#allocation5], %s170
          %s172 = sand.u32 %s48, 1
          %s173 = smul.addr %s172, 8
          %s174 = scalar_lea.vmem [#allocation4], %s173
          %176 = vsyncadd %s171, 0
          %s177 = sadd.s32 %s32, %s31
          %s178 = smul.addr %s177, 8
          %s179 = scalar_lea.hbm %s1, %s178
          %s181 = sshll.u32 %s179, 4
          %s182 = int_to_ptr.hbm [resolvable:$true] %s181
          %s183 = sshll.u32 %s174, 4
          %s184 = int_to_ptr.vmem [resolvable:$true] %s183
          %186 = dma.hbm_to_vmem [thread:$0]  %s182, 128, %s184, %s171
        $region20: #{tpu_custom_call.1} parent=15 // pred_fallthru
          _
        // Predicated region
        $region21: #{tpu_custom_call.1} parent=15 // pred_check
          %p187 = pneg %p86
        $region22: #{tpu_custom_call.1} parent=15 // pred_check_branch
          %189 = sbr.rel (%p187) target = $region24
        $region23: #{tpu_custom_call.1} parent=15 // pred_region
          %s190 = sand.u32 %s76, 1
          %s191 = scalar_lea.sflag [#allocation8], %s190
          %s192 = sand.u32 %s76, 1
          %s193 = smul.addr %s192, 8
          %s194 = scalar_lea.vmem [#allocation7], %s193
          %196 = vsyncadd %s191, 0
          %s197 = sadd.s32 %s32, %s31
          %s198 = smul.addr %s197, 8
          %s199 = scalar_lea.hbm %s2, %s198
          %s201 = sshll.u32 %s199, 4
          %s202 = int_to_ptr.hbm [resolvable:$true] %s201
          %s203 = sshll.u32 %s194, 4
          %s204 = int_to_ptr.vmem [resolvable:$true] %s203
          %206 = dma.hbm_to_vmem [thread:$0]  %s202, 128, %s204, %s191
        $region24: #{tpu_custom_call.1} parent=15 // pred_fallthru
          _
      $region16: #{tpu_custom_call.1} parent=5 // pred_fallthru
        _
      %p207 = scmp.le.s32.totalorder 1, %s24
      %p208 = scmp.lt.s32.totalorder %s24, 3
      %p209 = pnand %p207, %p208
      %p210 = pneg %p209
      // Predicated region
      $region25: #{tpu_custom_call.1} parent=5 // pred_check
        _
      $region26: #{tpu_custom_call.1} parent=5 // pred_check_branch
        %212 = sbr.rel (%p209) target = $region28
      $region27: #{tpu_custom_call.1} parent=5 // pred_region
        %s213 = ssub.s32 %s24, 1
        %s214 = sand.u32 %s51, 1
        %s215 = scalar_lea.sflag [#allocation5], %s214
        %s216 = sand.u32 %s51, 1
        %s217 = smul.addr %s216, 8
        %s218 = scalar_lea.vmem [#allocation4], %s217
        // Predicated region
        $region29: #{tpu_custom_call.1} parent=27 // pred_check
          %p219 = pneg %p64
        $region30: #{tpu_custom_call.1} parent=27 // pred_check_branch
          %221 = sbr.rel (%p219) target = $region32
        $region31: #{tpu_custom_call.1} parent=27 // pred_region
          %223 = dma.done %s215, 128
        $region32: #{tpu_custom_call.1} parent=27 // pred_fallthru
          _
        %s224 = sand.u32 %s79, 1
        %s225 = scalar_lea.sflag [#allocation8], %s224
        %s226 = sand.u32 %s79, 1
        %s227 = smul.addr %s226, 8
        %s228 = scalar_lea.vmem [#allocation7], %s227
        // Predicated region
        $region33: #{tpu_custom_call.1} parent=27 // pred_check
          %p229 = pneg %p92
        $region34: #{tpu_custom_call.1} parent=27 // pred_check_branch
          %231 = sbr.rel (%p229) target = $region36
        $region35: #{tpu_custom_call.1} parent=27 // pred_region
          %233 = dma.done %s225, 128
        $region36: #{tpu_custom_call.1} parent=27 // pred_fallthru
          _
        %s234 = sand.u32 %s51, 1
        %s235 = scalar_lea.sflag [#allocation5], %s234
        %s236 = sand.u32 %s51, 1
        %s237 = smul.addr %s236, 8
        %s238 = scalar_lea.vmem [#allocation4], %s237
        %p239 = pneg %p64
        %p240 = pneg %p61
        %s241 = sand.u32 %s79, 1
        %s242 = scalar_lea.sflag [#allocation8], %s241
        %s243 = sand.u32 %s79, 1
        %s244 = smul.addr %s243, 8
        %s245 = scalar_lea.vmem [#allocation7], %s244
        %p246 = pneg %p92
        %p247 = pneg %p89
        %p248 = pneg %p120
        %p249 = pneg %p117
        %s250 = sand.u32 %s107, 1
        %s251 = scalar_lea.sflag [#allocation6], %s250
        %s252 = sand.u32 %s107, 1
        %s253 = smul.addr %s252, 8
        %s254 = scalar_lea.vmem [#allocation9], %s253
        %p255 = pneg %p148
        %p256 = pneg %p145
        %s257 = sand.u32 %s135, 1
        %s258 = scalar_lea.sflag [#allocation11], %s257
        %s259 = sand.u32 %s135, 1
        %s260 = smul.addr %s259, 8
        %s261 = scalar_lea.vmem [#allocation10], %s260
        %262 = vst [vmem:[%s254] sm:$0xff] 0.0
        %263 = vst [vmem:[%s261] sm:$0xff] 0.0
        %v264 = vld [vmem:[%s218] sm:$0xff]
        %v265 = vld [vmem:[%s228] sm:$0xff]
        %v266 = vadd.f32 %v264, 0.0
        %v267 = vmul.f32 %v266, 0.5
        %v268 = vtanh.pop %v267
        %v269 = vmul.f32 %v268, 0.5
        %v270 = vadd.f32 %v269, 0.5
        %v271 = vld [vmem:[%s254] sm:$0xff]
        %v272 = vmul.f32 %v270, %v265
        %v273 = vadd.f32 %v272, 0.0
        %v274 = vadd.f32 %v271, %v273
        %275 = vst [vmem:[%s254] sm:$0xff] %v274
        %v276 = vld [vmem:[%s261] sm:$0xff]
        %v277 = vadd.f32 %v270, %v265
        %v278 = vadd.f32 %v277, 0.0
        %v279 = vadd.f32 %v276, %v278
        %280 = vst [vmem:[%s261] sm:$0xff] %v279
        %s281 = sand.u32 %s107, 1
        %s282 = scalar_lea.sflag [#allocation6], %s281
        %s283 = sand.u32 %s107, 1
        %s284 = smul.addr %s283, 8
        %s285 = scalar_lea.vmem [#allocation9], %s284
        %s286 = sand.u32 %s135, 1
        %s287 = scalar_lea.sflag [#allocation11], %s286
        %s288 = sand.u32 %s135, 1
        %s289 = smul.addr %s288, 8
        %s290 = scalar_lea.vmem [#allocation10], %s289
        // Predicated region
        $region37: #{tpu_custom_call.1} parent=27 // pred_check
          %p291 = pneg %p117
        $region38: #{tpu_custom_call.1} parent=27 // pred_check_branch
          %293 = sbr.rel (%p291) target = $region40
        $region39: #{tpu_custom_call.1} parent=27 // pred_region
          %295 = vsyncadd %s282, 0
          %s296 = sadd.s32 %s34, %s33
          %s297 = smul.addr %s296, 8
          %s298 = scalar_lea.hbm %s3, %s297
          %s300 = sshll.u32 %s285, 4
          %s301 = int_to_ptr.vmem [resolvable:$true] %s300
          %s302 = sshll.u32 %s298, 4
          %s303 = int_to_ptr.hbm [resolvable:$true] %s302
          %305 = dma.vmem_to_hbm [thread:$0]  %s301, 128, %s303, %s282
        $region40: #{tpu_custom_call.1} parent=27 // pred_fallthru
          _
        // Predicated region
        $region41: #{tpu_custom_call.1} parent=27 // pred_check
          %p306 = pneg %p145
        $region42: #{tpu_custom_call.1} parent=27 // pred_check_branch
          %308 = sbr.rel (%p306) target = $region44
        $region43: #{tpu_custom_call.1} parent=27 // pred_region
          %310 = vsyncadd %s287, 0
          %s311 = sadd.s32 %s34, %s33
          %s312 = smul.addr %s311, 8
          %s313 = scalar_lea.hbm %s4, %s312
          %s315 = sshll.u32 %s290, 4
          %s316 = int_to_ptr.vmem [resolvable:$true] %s315
          %s317 = sshll.u32 %s313, 4
          %s318 = int_to_ptr.hbm [resolvable:$true] %s317
          %320 = dma.vmem_to_hbm [thread:$0]  %s316, 128, %s318, %s287
        $region44: #{tpu_custom_call.1} parent=27 // pred_fallthru
          _
      $region28: #{tpu_custom_call.1} parent=5 // pred_fallthru
        _
      %p321 = scmp.le.s32.totalorder 2, %s24
      // Predicated region
      $region45: #{tpu_custom_call.1} parent=5 // pred_check
        %p322 = pneg %p321
      $region46: #{tpu_custom_call.1} parent=5 // pred_check_branch
        %324 = sbr.rel (%p322) target = $region48
      $region47: #{tpu_custom_call.1} parent=5 // pred_region
        %s325 = ssub.s32 %s24, 2
        // Predicated region
        $region49: #{tpu_custom_call.1} parent=47 // pred_check
          %p326 = pneg %p123
        $region50: #{tpu_custom_call.1} parent=47 // pred_check_branch
          %328 = sbr.rel (%p326) target = $region52
        $region51: #{tpu_custom_call.1} parent=47 // pred_region
          %s329 = sand.u32 %s108, 1
          %s330 = scalar_lea.sflag [#allocation6], %s329
          %s331 = sand.u32 %s108, 1
          %s332 = smul.addr %s331, 8
          %s333 = scalar_lea.vmem [#allocation9], %s332
          %335 = dma.done %s330, 128
        $region52: #{tpu_custom_call.1} parent=47 // pred_fallthru
          _
        // Predicated region
        $region53: #{tpu_custom_call.1} parent=47 // pred_check
          %p336 = pneg %p151
        $region54: #{tpu_custom_call.1} parent=47 // pred_check_branch
          %338 = sbr.rel (%p336) target = $region56
        $region55: #{tpu_custom_call.1} parent=47 // pred_region
          %s339 = sand.u32 %s136, 1
          %s340 = scalar_lea.sflag [#allocation11], %s339
          %s341 = sand.u32 %s136, 1
          %s342 = smul.addr %s341, 8
          %s343 = scalar_lea.vmem [#allocation10], %s342
          %345 = dma.done %s340, 128
        $region56: #{tpu_custom_call.1} parent=47 // pred_fallthru
          _
      $region48: #{tpu_custom_call.1} parent=5 // pred_fallthru
        _
    $region6: #{tpu_custom_call.1} parent=1 // loop_footer
      %s28 = sadd.s32 1, %s24
    $region7: #{tpu_custom_call.1} parent=1 // loop_footer_branch
      %23 = sbr.rel target = $region3
    $region8: #{tpu_custom_call.1} parent=1 // loop_exit
      _
    %346 = vsyncpa [#allocation5], 1
    %s347 = scalar_lea.sflag [#allocation5], 1
    %348 = vsyncpa %s347, 1
    %349 = vsyncpa [#allocation8], 1
    %s350 = scalar_lea.sflag [#allocation8], 1
    %351 = vsyncpa %s350, 1
    %352 = vsyncpa [#allocation6], 1
    %s353 = scalar_lea.sflag [#allocation6], 1
    %354 = vsyncpa %s353, 1
    %355 = vsyncpa [#allocation11], 1
    %s356 = scalar_lea.sflag [#allocation11], 1
    %357 = vsyncpa %s356, 1

</llo_original>
